<compile_context>
chip_gen: v7x
topology: tpu7x:2x2x1
jax: 0.10.0
libtpu: 0.0.40
codegen_flags: <defaults>
</compile_context>

<pallas_src>
import functools

import jax
import jax.numpy as jnp
from jax.experimental import pallas as pl
from jax.experimental.pallas import tpu as pltpu


def _cdiv(a: int, b: int) -> int:
    return -(-a // b)


def _round_up(x: int, m: int) -> int:
    return _cdiv(x, m) * m


def _pick_tile(dim: int, align: int, tmax: int):
    """Pick (tile, padded_dim).

    If the dim fits in one tile, use the full dim (block == full array dim,
    no padding).  Otherwise split into near-equal `align`-multiple tiles so a
    dim just past a tile boundary doesn't double the padded extent.
    """
    if dim <= tmax:
        return dim, dim
    d = _round_up(dim, align)
    nblocks = _cdiv(d, tmax)
    tile = _round_up(_cdiv(d, nblocks), align)
    return tile, tile * nblocks


def _default_config():
    """Per-generation tile caps + VMEM budget."""
    tm_max, tn_max, tk_max = 512, 512, 1024
    vmem_limit = 48 * 1024 * 1024  # safe on v7x's 64 MiB physical VMEM per TC
    try:
        vmem_cap = pltpu.get_tpu_info().vmem_capacity_bytes
        if vmem_cap >= 96 * 1024 * 1024:  # v5e / v6e: 128 MiB physical
            vmem_limit = 64 * 1024 * 1024
    except Exception:
        pass  # conservative fallback works on every generation
    return tm_max, tn_max, tk_max, vmem_limit


# ---------------------------------------------------------------------------
# Kernels
# ---------------------------------------------------------------------------

def _kernel_f32_out(x_ref, w_ref, b_ref, o_ref, *, mxu_dtype):
    """f32 output: accumulate directly into the resident output block."""
    k = pl.program_id(2)

    @pl.when(k == 0)
    def _init():
        o_ref[...] = jnp.zeros_like(o_ref)

    x = x_ref[...]
    w = w_ref[...]
    if mxu_dtype is not None:
        x = x.astype(mxu_dtype)
        w = w.astype(mxu_dtype)
    # Pure MXU accumulate in the K loop (no per-k VPU epilogue work).
    o_ref[...] += jnp.dot(x, w, preferred_element_type=jnp.float32)

    @pl.when(k == pl.num_programs(2) - 1)
    def _epilogue():
        o_ref[...] = jnp.maximum(o_ref[...] + b_ref[...].astype(jnp.float32), 0.0)


def _kernel_generic(x_ref, w_ref, b_ref, o_ref, acc_ref, *, mxu_dtype):
    """Non-f32 output: f32 VMEM accumulator, cast only in the epilogue."""
    k = pl.program_id(2)

    @pl.when(k == 0)
    def _init():
        acc_ref[...] = jnp.zeros_like(acc_ref)

    x = x_ref[...]
    w = w_ref[...]
    if mxu_dtype is not None:
        x = x.astype(mxu_dtype)
        w = w.astype(mxu_dtype)
    acc_ref[...] += jnp.dot(x, w, preferred_element_type=jnp.float32)

    @pl.when(k == pl.num_programs(2) - 1)
    def _epilogue():
        acc = acc_ref[...] + b_ref[...].astype(jnp.float32)
        o_ref[...] = jnp.maximum(acc, 0.0).astype(o_ref.dtype)


# ---------------------------------------------------------------------------
# pallas_call wrapper
# ---------------------------------------------------------------------------

def _pallas_linear_relu(x_p, w_p, b_p, *, out_dtype, tm, tn, tk, vmem_limit,
                        mxu_dtype):
    Mp, Kp = x_p.shape
    Kp2, Np = w_p.shape
    assert Kp == Kp2, (Kp, Kp2)
    grid = (Mp // tm, Np // tn, Kp // tk)

    in_itemsize = jnp.dtype(x_p.dtype).itemsize
    out_itemsize = jnp.dtype(out_dtype).itemsize
    # Real tiled HBM traffic including re-read factors.
    bytes_accessed = (
        (Mp * Kp * (Np // tn) + Kp * Np * (Mp // tm)) * in_itemsize
        + Np * jnp.dtype(b_p.dtype).itemsize
        + Mp * Np * out_itemsize
    )

    f32_out = jnp.dtype(out_dtype) == jnp.dtype(jnp.float32)
    if f32_out:
        kernel = functools.partial(_kernel_f32_out, mxu_dtype=mxu_dtype)
        scratch_shapes = ()
    else:
        kernel = functools.partial(_kernel_generic, mxu_dtype=mxu_dtype)
        scratch_shapes = (pltpu.VMEM((tm, tn), jnp.float32),)

    return pl.pallas_call(
        kernel,
        out_shape=jax.ShapeDtypeStruct((Mp, Np), out_dtype),
        grid=grid,
        in_specs=[
            pl.BlockSpec((tm, tk), lambda i, j, k: (i, k)),
            pl.BlockSpec((tk, tn), lambda i, j, k: (k, j)),
            pl.BlockSpec((1, tn), lambda i, j, k: (0, j)),
        ],
        out_specs=pl.BlockSpec((tm, tn), lambda i, j, k: (i, j)),
        scratch_shapes=scratch_shapes,
        compiler_params=pltpu.CompilerParams(
            dimension_semantics=("parallel", "parallel", "arbitrary"),
            vmem_limit_bytes=vmem_limit,
        ),
        cost_estimate=pl.CostEstimate(
            flops=2 * Mp * Np * Kp,
            transcendentals=0,
            bytes_accessed=bytes_accessed,
        ),
    )(x_p, w_p, b_p)


def make_linear_relu(w, b, *, tm_max=None, tn_max=None, tk_max=None,
                     mxu_dtype=None, out_dtype=None):
    """Build a fused relu(x @ w + b) callable.

    w: (K, N); b: (N,) or (1, N).  Weight/bias are padded ONCE here
    (weight-stationary); per call only x's M (and K, if padded) is padded.
    `mxu_dtype=jnp.bfloat16` runs the matmul on the bf16-native MXU with f32
    accumulation; default None keeps exact f32 (slower multi-pass MXU path).
    """
    K, N = w.shape
    d_tm, d_tn, d_tk, vmem_limit = _default_config()
    tm_max = d_tm if tm_max is None else tm_max
    tn_max = d_tn if tn_max is None else tn_max
    tk_max = d_tk if tk_max is None else tk_max

    tn, Np = _pick_tile(N, 128, tn_max)
    tk, Kp = _pick_tile(K, 128, tk_max)

    # One-time weight / bias padding (zero-pad is exact for the matmul).
    w_p = w if (Kp == K and Np == N) else jnp.pad(w, ((0, Kp - K), (0, Np - N)))
    b2 = jnp.reshape(b, (1, N))
    b_p = b2 if Np == N else jnp.pad(b2, ((0, 0), (0, Np - N)))

    def _fwd(x, w_pad, b_pad):
        leading = x.shape[:-1]
        Kx = x.shape[-1]
        assert Kx == K, (Kx, K)
        x2 = x.reshape((-1, K))
        M = x2.shape[0]
        odt = x.dtype if out_dtype is None else out_dtype

        tm, Mp = _pick_tile(M, 8, tm_max)
        x_p = x2 if (Mp == M and Kp == K) else jnp.pad(
            x2, ((0, Mp - M), (0, Kp - K)))

        # v7x megacore: guarantee >=2 blocks on a 'parallel' axis when M is
        # small enough to fit a single tile.
        tn_call = tn
        if Mp // tm == 1 and Np // tn_call == 1 and tn_call % 256 == 0:
            tn_call //= 2

        out_p = _pallas_linear_relu(
            x_p, w_pad, b_pad, out_dtype=odt, tm=tm, tn=tn_call, tk=tk,
            vmem_limit=vmem_limit, mxu_dtype=mxu_dtype)

        out = out_p if (Mp == M and Np == N) else out_p[:M, :N]
        return out.reshape(leading + (N,))

    fwd_jit = jax.jit(_fwd)
    return lambda x: fwd_jit(x, w_p, b_p)


if __name__ == "__main__":
    # Shapes implied by the module: Linear(input_size=32, output_size=64), batch=8.
    batch, input_size, output_size = 8, 32, 64

    key = jax.random.PRNGKey(0)
    kx, kw, kb = jax.random.split(key, 3)

    # Deterministic params mimicking nn.Linear's uniform(-1/sqrt(in), 1/sqrt(in)).
    bound = 1.0 / (input_size ** 0.5)
    w = jax.random.uniform(kw, (input_size, output_size), jnp.float32, -bound, bound)
    b = jax.random.uniform(kb, (output_size,), jnp.float32, -bound, bound)
    x = jax.random.normal(kx, (batch, input_size), jnp.float32)

    ref = jnp.maximum(x @ w + b[None, :], 0.0)

    # Exact f32 path.
    layer = make_linear_relu(w, b)
    out = jax.block_until_ready(layer(x))
    assert out.shape == (batch, output_size)
    assert jnp.allclose(out, ref, atol=1e-5, rtol=1e-5)

    # bf16-MXU path (f32 accumulation) — deliberate precision tradeoff.
    layer_bf16 = make_linear_relu(w, b, mxu_dtype=jnp.bfloat16)
    out_bf16 = jax.block_until_ready(layer_bf16(x))
    assert jnp.allclose(out_bf16, ref, atol=5e-2, rtol=5e-2)

    print("KERNEL_OK")
</pallas_src>

<mosaic_0001>
module attributes {stable_mosaic.version = 11 : i64} {
  func.func @_kernel_f32_out(%arg0: i32, %arg1: i32, %arg2: i32, %arg3: memref<8x32xf32, #tpu.memory_space<vmem>>, %arg4: memref<32x64xf32, #tpu.memory_space<vmem>>, %arg5: memref<1x64xf32, #tpu.memory_space<vmem>>, %arg6: memref<8x64xf32, #tpu.memory_space<vmem>>) attributes {dimension_semantics = [#tpu.dimension_semantics<parallel>, #tpu.dimension_semantics<parallel>, #tpu.dimension_semantics<arbitrary>], iteration_bounds = array<i64: 1, 1, 1>, scalar_prefetch = 0 : i64, scratch_operands = 0 : i64, tpu.core_type = #tpu.core_type<tc>, window_params = [{transform_indices = @transform_0, window_bounds = array<i64: 8, 32>}, {transform_indices = @transform_1, window_bounds = array<i64: 32, 64>}, {transform_indices = @transform_2, window_bounds = array<i64: 1, 64>}, {transform_indices = @transform_3, window_bounds = array<i64: 8, 64>}]} {
    %c0_i32 = arith.constant 0 : i32
    %0 = arith.cmpi eq, %arg2, %c0_i32 : i32
    %1 = arith.extui %0 : i1 to i32
    %c0_i32_0 = arith.constant 0 : i32
    %2 = arith.cmpi ne, %1, %c0_i32_0 : i32
    scf.if %2 {
      %cst_10 = arith.constant 0.000000e+00 : f32
      %12 = vector.broadcast %cst_10 : f32 to vector<8x64xf32>
      %c0_11 = arith.constant 0 : index
      %c0_12 = arith.constant 0 : index
      %13 = vector.load %arg6[%c0_11, %c0_12] : memref<8x64xf32, #tpu.memory_space<vmem>>, vector<8x64xf32>
      tpu.vector_store %arg6[%c0_11, %c0_12], %12 {strides = array<i32>} : memref<8x64xf32, #tpu.memory_space<vmem>>, vector<8x64xf32>,
    } else {
    }
    %c0 = arith.constant 0 : index
    %c0_1 = arith.constant 0 : index
    %3 = vector.load %arg3[%c0, %c0_1] : memref<8x32xf32, #tpu.memory_space<vmem>>, vector<8x32xf32>
    %c0_2 = arith.constant 0 : index
    %c0_3 = arith.constant 0 : index
    %4 = vector.load %arg4[%c0_2, %c0_3] : memref<32x64xf32, #tpu.memory_space<vmem>>, vector<32x64xf32>
    %c0_4 = arith.constant 0 : index
    %c0_5 = arith.constant 0 : index
    %5 = vector.load %arg6[%c0_4, %c0_5] : memref<8x64xf32, #tpu.memory_space<vmem>>, vector<8x64xf32>
    %cst = arith.constant dense<0.000000e+00> : vector<8x64xf32>
    %6 = tpu.matmul %3, %4, %cst {dimension_numbers = #tpu.dot_dimension_numbers<[1], [0], [0], [1], [0, 0, 1, 1], [], []>} : vector<8x32xf32>, vector<32x64xf32>, vector<8x64xf32> -> vector<8x64xf32>
    %7 = arith.addf %5, %6 : vector<8x64xf32>
    %c0_6 = arith.constant 0 : index
    %c0_7 = arith.constant 0 : index
    %8 = vector.load %arg6[%c0_6, %c0_7] : memref<8x64xf32, #tpu.memory_space<vmem>>, vector<8x64xf32>
    tpu.vector_store %arg6[%c0_6, %c0_7], %7 {strides = array<i32>} : memref<8x64xf32, #tpu.memory_space<vmem>>, vector<8x64xf32>,
    %c0_i32_8 = arith.constant 0 : i32
    %9 = arith.cmpi eq, %arg2, %c0_i32_8 : i32
    %10 = arith.extui %9 : i1 to i32
    %c0_i32_9 = arith.constant 0 : i32
    %11 = arith.cmpi ne, %10, %c0_i32_9 : i32
    scf.if %11 {
      %c0_10 = arith.constant 0 : index
      %c0_11 = arith.constant 0 : index
      %12 = vector.load %arg6[%c0_10, %c0_11] : memref<8x64xf32, #tpu.memory_space<vmem>>, vector<8x64xf32>
      %c0_12 = arith.constant 0 : index
      %c0_13 = arith.constant 0 : index
      %13 = vector.load %arg5[%c0_12, %c0_13] : memref<1x64xf32, #tpu.memory_space<vmem>>, vector<1x64xf32>
      %14 = vector.broadcast %13 : vector<1x64xf32> to vector<8x64xf32>
      %15 = arith.addf %12, %14 : vector<8x64xf32>
      %cst_14 = arith.constant 0.000000e+00 : f32
      %16 = vector.broadcast %cst_14 : f32 to vector<8x64xf32>
      %17 = arith.maximumf %15, %16 : vector<8x64xf32>
      %c0_15 = arith.constant 0 : index
      %c0_16 = arith.constant 0 : index
      %18 = vector.load %arg6[%c0_15, %c0_16] : memref<8x64xf32, #tpu.memory_space<vmem>>, vector<8x64xf32>
      tpu.vector_store %arg6[%c0_15, %c0_16], %17 {strides = array<i32>} : memref<8x64xf32, #tpu.memory_space<vmem>>, vector<8x64xf32>,
    } else {
    }
    return
  }
  func.func @transform_0(%arg0: i32, %arg1: i32, %arg2: i32) -> (i32, i32) {
    %c0_i32 = arith.constant 0 : i32
    return %arg0, %arg2 : i32, i32
  }
  func.func @transform_1(%arg0: i32, %arg1: i32, %arg2: i32) -> (i32, i32) {
    %c0_i32 = arith.constant 0 : i32
    return %arg2, %arg1 : i32, i32
  }
  func.func @transform_2(%arg0: i32, %arg1: i32, %arg2: i32) -> (i32, i32) {
    %c0_i32 = arith.constant 0 : i32
    %c0_i32_0 = arith.constant 0 : i32
    return %c0_i32, %arg1 : i32, i32
  }
  func.func @transform_3(%arg0: i32, %arg1: i32, %arg2: i32) -> (i32, i32) {
    %c0_i32 = arith.constant 0 : i32
    return %arg0, %arg1 : i32, i32
  }
}

</mosaic_0001>

<llo_original>
// kernel: _fwd.1
$region0: #{_fwd.1}
  #allocation0 [shape = 'u32[]', space=smem, size = 0x4, offset = 0x4, fixed_abs, tag = 'smem constant byte address 0x4 - core index']
  #allocation1 [shape = 'u32[144,128]{1,0:T(1,128)}', space=vmem, size = 0x12000, scoped, tag = 'internal scratch']
  %s0 = inlined_call_operand.hbm [shape: f32[8,32], index: 0, kind: input, shape index: {}]
  %s1 = inlined_call_operand.hbm [shape: f32[32,64], index: 1, kind: input, shape index: {}]
  %s2 = inlined_call_operand.vmem [shape: f32[1,64], index: 2, kind: input, shape index: {}]
  %s3 = inlined_call_operand.hbm [shape: f32[8,64], index: 3, kind: output, shape index: {}]
  %s4 = sld [smem:[#allocation0]]
  $region38: #{_fwd.1} parent=0
    _
  %s6 = ssub.s32 1, %s4
  %s7 = scalar_select 0, %s6, %s4
  $region1: #{_fwd.1} parent=0
    #allocation2 [shape = 'u8[4096]{0}', space=vmem, size = 0x1000, scoped, tag = 'input window, operand 0, single buffered']
    #allocation3 [shape = 's32[1]{0}', space=sflag, size = 0x4, scoped, tag = 'scoped memory for _fwd.1']
    #allocation4 [shape = 's32[1]{0}', space=sflag, size = 0x4, scoped, tag = 'scoped memory for _fwd.1']
    #allocation5 [shape = 'u8[16384]{0}', space=vmem, size = 0x4000, scoped, tag = 'input window, operand 1, single buffered']
    #allocation6 [shape = 's32[1]{0}', space=sflag, size = 0x4, scoped, tag = 'scoped memory for _fwd.1']
    #allocation7 [shape = 'u8[4096]{0}', space=vmem, size = 0x1000, scoped, tag = 'output window, operand 0, single buffered']
    %8 = vsyncpa [#allocation3], 0
    %9 = vsyncpa [#allocation6], 0
    %10 = vsyncpa [#allocation4], 0
    // Predicated region
    $region2: #{_fwd.1} parent=1 // pred_check
      _
    $region3: #{_fwd.1} parent=1 // pred_check_branch
      %12 = sbr.rel (0) target = $region5
    $region4: #{_fwd.1} parent=1 // pred_region
      %s14 = ssub.s32 128, 128
      %15 = vsyncadd [#allocation3], %s14
      %s17 = sshll.u32 [#allocation2], 4
      %s18 = int_to_ptr.vmem [resolvable:$true] %s17
      %20 = dma.hbm_to_vmem [thread:$0]  %s0, 128, %s18, [#allocation3]
    $region5: #{_fwd.1} parent=1 // pred_fallthru
      _
    // Predicated region
    $region6: #{_fwd.1} parent=1 // pred_check
      _
    $region7: #{_fwd.1} parent=1 // pred_check_branch
      %22 = sbr.rel (0) target = $region9
    $region8: #{_fwd.1} parent=1 // pred_region
      %s24 = ssub.s32 512, 512
      %25 = vsyncadd [#allocation6], %s24
      %s26 = sshll.u32 [#allocation5], 4
      %s27 = int_to_ptr.vmem [resolvable:$true] %s26
      %32 = dma.hbm_to_vmem [thread:$0]  %s1, 512, %s27, [#allocation6], 128, 128, 8
    $region9: #{_fwd.1} parent=1 // pred_fallthru
      _
    // Predicated region
    $region10: #{_fwd.1} parent=1 // pred_check
      _
    $region11: #{_fwd.1} parent=1 // pred_check_branch
      %34 = sbr.rel (0) target = $region13
    $region12: #{_fwd.1} parent=1 // pred_region
      _
    $region13: #{_fwd.1} parent=1 // pred_fallthru
      _
    // Predicated region
    $region14: #{_fwd.1} parent=1 // pred_check
      _
    $region15: #{_fwd.1} parent=1 // pred_check_branch
      %36 = sbr.rel (0) target = $region17
    $region16: #{_fwd.1} parent=1 // pred_region
      %37 = dma.done [#allocation3], 128
    $region17: #{_fwd.1} parent=1 // pred_fallthru
      _
    // Predicated region
    $region18: #{_fwd.1} parent=1 // pred_check
      _
    $region19: #{_fwd.1} parent=1 // pred_check_branch
      %39 = sbr.rel (0) target = $region21
    $region20: #{_fwd.1} parent=1 // pred_region
      %40 = dma.done [#allocation6], 512
    $region21: #{_fwd.1} parent=1 // pred_fallthru
      _
    %p41 = scmp.eq.s32.totalorder 0, 0
    // Predicated region
    $region22: #{_fwd.1} parent=1 // pred_check
      %p42 = pneg %p41
    $region23: #{_fwd.1} parent=1 // pred_check_branch
      %44 = sbr.rel (%p42) target = $region25
    $region24: #{_fwd.1} parent=1 // pred_region
      %vm45 = vcmask 523264
      %46 = vst.msk [vmem:[#allocation7] sm:$0xff] %vm45, 0.0
    $region25: #{_fwd.1} parent=1 // pred_fallthru
      _
    %v47 = vld [vmem:[#allocation2] sm:$0xff]
    %v48 = vld [vmem:[#allocation5] sm:$0xff]
    %v49 = vld [vmem:[#allocation5 + $0x8] sm:$0xff]
    %v50 = vld [vmem:[#allocation5 + $0x10] sm:$0xff]
    %v51 = vld [vmem:[#allocation5 + $0x18] sm:$0xff]
    %v52 = vld [vmem:[#allocation7] sm:$0xff]
    %vm53 = vcmask 261120
    %v55 = vsel %vm53, %v47, 0
    %57 = vmatprep.subr.mxu0 0.0
    %58 = vmatpush1.msra.mxu0 %v48
    %59 = vmatprep.subr.mxu0 0.0
    %60 = vmatpush1.msra.mxu0 %v49
    %61 = vmatprep.subr.mxu0 0.0
    %62 = vmatpush1.msra.mxu0 %v50
    %63 = vmatprep.subr.mxu0 0.0
    %64 = vmatpush1.msra.mxu0 %v51
    %65 = vmatprep.subr.mxu0 0.0
    %66 = vmatpush1.msra.mxu0 0.0
    %67 = vmatprep.subr.mxu0 0.0
    %68 = vmatpush1.msra.mxu0 0.0
    %69 = vmatprep.subr.mxu0 0.0
    %70 = vmatpush1.msra.mxu0 0.0
    %71 = vmatprep.subr.mxu0 0.0
    %72 = vmatpush1.msra.mxu0 0.0
    %73 = vmatprep.subr.mxu0 0.0
    %74 = vmatpush1.msra.mxu0 0.0
    %75 = vmatprep.subr.mxu0 0.0
    %76 = vmatpush1.msra.mxu0 0.0
    %77 = vmatprep.subr.mxu0 0.0
    %78 = vmatpush1.msra.mxu0 0.0
    %79 = vmatprep.subr.mxu0 0.0
    %80 = vmatpush1.msra.mxu0 0.0
    %81 = vmatprep.subr.mxu0 0.0
    %82 = vmatpush1.msra.mxu0 0.0
    %83 = vmatprep.subr.mxu0 0.0
    %84 = vmatpush1.msra.mxu0 0.0
    %85 = vmatprep.subr.mxu0 0.0
    %86 = vmatpush1.msra.mxu0 0.0
    %87 = vmatprep.subr.mxu0 0.0
    %88 = vmatpush1.msra.mxu0 0.0
    %89 = vmatprep.subr.mxu0 0.0
    %90 = vmatpush1.msra.mxu0 0.0
    %91 = vmatprep.subr.mxu0 0.0
    %92 = vmatpush1.msra.mxu0 0.0
    %93 = vmatprep.subr.mxu0 0.0
    %94 = vmatpush1.msra.mxu0 0.0
    %95 = vmatprep.subr.mxu0 0.0
    %96 = vmatpush1.msra.mxu0 0.0
    %97 = vmatprep.subr.mxu0 0.0
    %98 = vmatpush1.msra.mxu0 0.0
    %99 = vmatprep.subr.mxu0 0.0
    %100 = vmatpush1.msra.mxu0 0.0
    %101 = vmatprep.subr.mxu0 0.0
    %102 = vmatpush1.msra.mxu0 0.0
    %103 = vmatprep.subr.mxu0 0.0
    %104 = vmatpush1.msra.mxu0 0.0
    %105 = vmatprep.subr.mxu0 0.0
    %106 = vmatpush1.msra.mxu0 0.0
    %107 = vmatprep.subr.mxu0 0.0
    %108 = vmatpush1.msra.mxu0 0.0
    %109 = vmatprep.subr.mxu0 0.0
    %110 = vmatpush1.msra.mxu0 0.0
    %111 = vmatprep.subr.mxu0 0.0
    %112 = vmatpush1.msra.mxu0 0.0
    %113 = vmatprep.subr.mxu0 0.0
    %114 = vmatpush1.msra.mxu0 0.0
    %115 = vmatprep.subr.mxu0 0.0
    %116 = vmatpush1.msra.mxu0 0.0
    %117 = vmatprep.subr.mxu0 0.0
    %118 = vmatpush1.msra.mxu0 0.0
    %119 = vmatprep.subr.mxu0 0.0
    %120 = vmatpush1.msra.mxu0 0.0
    %121 = vmatprep.mubr.f32.mxu0 0.0
    %122 = vmatmul.mubr.f32.gmra.mrb[0].mxu0 %v55
    %v123 = vpop.f32.mrb[0].mxu0
    %v124 = vadd.f32 0.0, %v123
    %v125 = vpop.f32.mrb[0].mxu0
    %126 = vdwg.mxu0
    %v127 = vadd.f32 %v52, %v124
    %vm128 = vcmask 523264
    %129 = vst.msk [vmem:[#allocation7] sm:$0xff] %vm128, %v127
    // Predicated region
    $region26: #{_fwd.1} parent=1 // pred_check
      %p130 = pneg %p41
    $region27: #{_fwd.1} parent=1 // pred_check_branch
      %132 = sbr.rel (%p130) target = $region29
    $region28: #{_fwd.1} parent=1 // pred_region
      %v133 = vld [vmem:[#allocation7] sm:$0xff]
      %v134 = vld [vmem:[%s2] sm:$0x1]
      %v136 = vlaneseq
      %v137 = vshrl.u32 %v136, 7
      %v138 = vsub.s32 0, %v137
      %v139 = vrot.slane %v134, %v138
      %v141 = vadd.f32 %v133, %v139
      %v142 = vmax.f32 %v141, 0.0
      %143 = vst.msk [vmem:[#allocation7] sm:$0xff] %vm128, %v142
    $region29: #{_fwd.1} parent=1 // pred_fallthru
      _
    // Predicated region
    $region30: #{_fwd.1} parent=1 // pred_check
      _
    $region31: #{_fwd.1} parent=1 // pred_check_branch
      %145 = sbr.rel (0) target = $region33
    $region32: #{_fwd.1} parent=1 // pred_region
      %s147 = ssub.s32 128, 128
      %148 = vsyncadd [#allocation4], %s147
      %s150 = sshll.u32 [#allocation7], 4
      %s151 = int_to_ptr.vmem [resolvable:$true] %s150
      %153 = dma.vmem_to_hbm [thread:$0]  %s151, 128, %s3, [#allocation4]
    $region33: #{_fwd.1} parent=1 // pred_fallthru
      _
    // Predicated region
    $region34: #{_fwd.1} parent=1 // pred_check
      _
    $region35: #{_fwd.1} parent=1 // pred_check_branch
      %155 = sbr.rel (0) target = $region37
    $region36: #{_fwd.1} parent=1 // pred_region
      %156 = dma.done [#allocation4], 128
    $region37: #{_fwd.1} parent=1 // pred_fallthru
      _
    %157 = vsyncpa [#allocation3], 1
    %158 = vsyncpa [#allocation6], 1
    %159 = vsyncpa [#allocation4], 1

</llo_original>
